<compile_context>
chip_gen: v6e
topology: v6e:2x2x1
jax: 0.10.0
libtpu: 0.0.40
codegen_flags: <defaults>
</compile_context>

<pallas_src>
import math

import jax
import jax.numpy as jnp
from jax.experimental import pallas as pl
from jax.experimental.pallas import tpu as pltpu

OUT_PAD = 128  # lane-dense padded width of the final layer


def _round_up(n, m):
    return ((n + m - 1) // m) * m


def pid_tuner_kernel(x_ref,
                     w1_ref, b1_ref,
                     w2_ref, b2_ref,
                     w3_ref, b3_ref,
                     w4_ref, b4_ref,
                     o_ref):
    """One (TILE_B, 3) batch tile -> (TILE_B, OUT_PAD) lane-dense output tile."""

    def leaky_relu(h):
        return jnp.where(h > 0, h, 0.01 * h)

    x = x_ref[...]                                   # (TILE_B, 3) f32

    # ---- Layer 1: K=3 -> VPU broadcast-MAC, skip the MXU entirely. ----
    w1 = w1_ref[...].astype(jnp.float32)             # (3, 128)
    h = (x[:, 0:1] * w1[0:1, :]
         + x[:, 1:2] * w1[1:2, :]
         + x[:, 2:3] * w1[2:3, :]
         + b1_ref[...])
    h = leaky_relu(h)

    # ---- Layer 2: 128 -> 256 (MXU, f32 accumulate). ----
    h = jnp.dot(h, w2_ref[...].astype(jnp.float32),
                preferred_element_type=jnp.float32) + b2_ref[...]
    h = leaky_relu(h)

    # ---- Layer 3: 256 -> 128. ----
    h = jnp.dot(h, w3_ref[...].astype(jnp.float32),
                preferred_element_type=jnp.float32) + b3_ref[...]
    h = leaky_relu(h)

    # ---- Layer 4: 128 -> 128 (zero-padded from 3) so the store is lane-dense. ----
    h = jnp.dot(h, w4_ref[...].astype(jnp.float32),
                preferred_element_type=jnp.float32) + b4_ref[...]
    h = jnp.maximum(h, 0.0) + 0.0001                 # ReLU + 0.0001

    o_ref[...] = h.astype(o_ref.dtype)


def pid_tuner_forward(x, params, *, tile_b=256):
    """x: (B, 3) float32.  params: w1..w4 (in,out) bf16, b1..b4 (1,out) f32."""
    B = x.shape[0]

    # Tile the batch: 256 rows fills the v6e/v7x MXU; clamp (multiple of 8) for tiny B.
    tile_b = min(tile_b, _round_up(max(B, 1), 8))
    b_pad = _round_up(B, tile_b)
    if b_pad != B:
        x = jnp.pad(x, ((0, b_pad - B), (0, 0)))

    # Pad last layer to 128 output lanes -> unmasked (lane-dense) output stores.
    w4p = jnp.pad(params["w4"], ((0, 0), (0, OUT_PAD - params["w4"].shape[1])))
    b4p = jnp.pad(params["b4"], ((0, 0), (0, OUT_PAD - params["b4"].shape[1])))

    grid = (pl.cdiv(b_pad, tile_b),)

    def resident(arr):
        # Same block index for every grid step -> loaded once, stays in VMEM.
        return pl.BlockSpec(arr.shape, lambda i: (0, 0))

    out = pl.pallas_call(
        pid_tuner_kernel,
        out_shape=jax.ShapeDtypeStruct((b_pad, OUT_PAD), jnp.float32),
        grid=grid,
        in_specs=[
            pl.BlockSpec((tile_b, 3), lambda i: (i, 0)),          # x tile
            resident(params["w1"]), resident(params["b1"]),
            resident(params["w2"]), resident(params["b2"]),
            resident(params["w3"]), resident(params["b3"]),
            resident(w4p), resident(b4p),
        ],
        out_specs=pl.BlockSpec((tile_b, OUT_PAD), lambda i: (i, 0)),
        compiler_params=pltpu.CompilerParams(
            dimension_semantics=("parallel",)),                   # megacore on v7x
    )(x, params["w1"], params["b1"], params["w2"], params["b2"],
      params["w3"], params["b3"], w4p, b4p)

    return out[:B, :3]


def init_params(key):
    """nn.Linear-style init: U(-1/sqrt(fan_in), +1/sqrt(fan_in)).

    Weights stored as bf16 (halves weight HBM traffic); biases stay f32.
    """
    dims = [(3, 128), (128, 256), (256, 128), (128, 3)]
    params = {}
    for i, (fan_in, fan_out) in enumerate(dims, start=1):
        key, kw, kb = jax.random.split(key, 3)
        bound = 1.0 / math.sqrt(fan_in)
        w = jax.random.uniform(kw, (fan_in, fan_out), jnp.float32,
                               minval=-bound, maxval=bound)
        b = jax.random.uniform(kb, (1, fan_out), jnp.float32,
                               minval=-bound, maxval=bound)
        params[f"w{i}"] = w.astype(jnp.bfloat16)
        params[f"b{i}"] = b
    return params


def reference_forward(x, params):
    """Plain-JAX reference (same bf16-rounded weights, f32 math)."""
    def leaky(h):
        return jnp.where(h > 0, h, 0.01 * h)
    w1 = params["w1"].astype(jnp.float32)
    w2 = params["w2"].astype(jnp.float32)
    w3 = params["w3"].astype(jnp.float32)
    w4 = params["w4"].astype(jnp.float32)
    h = leaky(jnp.dot(x, w1, preferred_element_type=jnp.float32) + params["b1"])
    h = leaky(jnp.dot(h, w2, preferred_element_type=jnp.float32) + params["b2"])
    h = leaky(jnp.dot(h, w3, preferred_element_type=jnp.float32) + params["b3"])
    h = jnp.dot(h, w4, preferred_element_type=jnp.float32) + params["b4"]
    return jnp.maximum(h, 0.0) + 0.0001


if __name__ == "__main__":
    key = jax.random.PRNGKey(0)
    key, kx1, kx2 = jax.random.split(key, 3)
    params = init_params(key)

    # Small batch (single grid step).
    B = 8
    x = jax.random.normal(kx1, (B, 3), jnp.float32)
    out = jax.block_until_ready(pid_tuner_forward(x, params))
    ref = reference_forward(x, params)
    assert out.shape == (B, 3)
    assert jnp.allclose(out, ref, atol=1e-4, rtol=1e-4), "mismatch vs reference (B=8)"

    # Larger, non-multiple batch: exercises the batch grid + padding + slicing path.
    B2 = 300
    x2 = jax.random.normal(kx2, (B2, 3), jnp.float32)
    out2 = jax.block_until_ready(pid_tuner_forward(x2, params, tile_b=128))
    ref2 = reference_forward(x2, params)
    assert out2.shape == (B2, 3)
    assert jnp.allclose(out2, ref2, atol=1e-4, rtol=1e-4), "mismatch vs reference (B=300)"

    print("KERNEL_OK")
</pallas_src>

<mosaic_0001>
module attributes {stable_mosaic.version = 11 : i64} {
  func.func @pid_tuner_kernel(%arg0: i32, %arg1: memref<8x3xf32, #tpu.memory_space<vmem>>, %arg2: memref<3x128xbf16, #tpu.memory_space<vmem>>, %arg3: memref<1x128xf32, #tpu.memory_space<vmem>>, %arg4: memref<128x256xbf16, #tpu.memory_space<vmem>>, %arg5: memref<1x256xf32, #tpu.memory_space<vmem>>, %arg6: memref<256x128xbf16, #tpu.memory_space<vmem>>, %arg7: memref<1x128xf32, #tpu.memory_space<vmem>>, %arg8: memref<128x128xbf16, #tpu.memory_space<vmem>>, %arg9: memref<1x128xf32, #tpu.memory_space<vmem>>, %arg10: memref<8x128xf32, #tpu.memory_space<vmem>>) attributes {dimension_semantics = [#tpu.dimension_semantics<parallel>], iteration_bounds = array<i64: 1>, scalar_prefetch = 0 : i64, scratch_operands = 0 : i64, tpu.core_type = #tpu.core_type<tc>, window_params = [{transform_indices = @transform_0, window_bounds = array<i64: 8, 3>}, {pipeline_mode = #tpu.pipeline_mode<synchronous>, transform_indices = @transform_1, window_bounds = array<i64: 3, 128>}, {pipeline_mode = #tpu.pipeline_mode<synchronous>, transform_indices = @transform_2, window_bounds = array<i64: 1, 128>}, {pipeline_mode = #tpu.pipeline_mode<synchronous>, transform_indices = @transform_3, window_bounds = array<i64: 128, 256>}, {pipeline_mode = #tpu.pipeline_mode<synchronous>, transform_indices = @transform_4, window_bounds = array<i64: 1, 256>}, {pipeline_mode = #tpu.pipeline_mode<synchronous>, transform_indices = @transform_5, window_bounds = array<i64: 256, 128>}, {pipeline_mode = #tpu.pipeline_mode<synchronous>, transform_indices = @transform_6, window_bounds = array<i64: 1, 128>}, {pipeline_mode = #tpu.pipeline_mode<synchronous>, transform_indices = @transform_7, window_bounds = array<i64: 128, 128>}, {pipeline_mode = #tpu.pipeline_mode<synchronous>, transform_indices = @transform_8, window_bounds = array<i64: 1, 128>}, {transform_indices = @transform_9, window_bounds = array<i64: 8, 128>}]} {
    %c0 = arith.constant 0 : index
    %c0_0 = arith.constant 0 : index
    %0 = vector.load %arg1[%c0, %c0_0] : memref<8x3xf32, #tpu.memory_space<vmem>>, vector<8x3xf32>
    %c0_1 = arith.constant 0 : index
    %c0_2 = arith.constant 0 : index
    %1 = vector.load %arg2[%c0_1, %c0_2] : memref<3x128xbf16, #tpu.memory_space<vmem>>, vector<3x128xbf16>
    %2 = arith.extf %1 : vector<3x128xbf16> to vector<3x128xf32>
    %3 = vector.extract_strided_slice %0 {offsets = [0, 0], sizes = [8, 1], strides = [1, 1]} : vector<8x3xf32> to vector<8x1xf32>
    %4 = vector.extract_strided_slice %2 {offsets = [0, 0], sizes = [1, 128], strides = [1, 1]} : vector<3x128xf32> to vector<1x128xf32>
    %5 = vector.broadcast %3 : vector<8x1xf32> to vector<8x128xf32>
    %6 = vector.broadcast %4 : vector<1x128xf32> to vector<8x128xf32>
    %7 = arith.mulf %5, %6 : vector<8x128xf32>
    %8 = vector.extract_strided_slice %0 {offsets = [0, 1], sizes = [8, 1], strides = [1, 1]} : vector<8x3xf32> to vector<8x1xf32>
    %9 = vector.extract_strided_slice %2 {offsets = [1, 0], sizes = [1, 128], strides = [1, 1]} : vector<3x128xf32> to vector<1x128xf32>
    %10 = vector.broadcast %8 : vector<8x1xf32> to vector<8x128xf32>
    %11 = vector.broadcast %9 : vector<1x128xf32> to vector<8x128xf32>
    %12 = arith.mulf %10, %11 : vector<8x128xf32>
    %13 = arith.addf %7, %12 : vector<8x128xf32>
    %14 = vector.extract_strided_slice %0 {offsets = [0, 2], sizes = [8, 1], strides = [1, 1]} : vector<8x3xf32> to vector<8x1xf32>
    %15 = vector.extract_strided_slice %2 {offsets = [2, 0], sizes = [1, 128], strides = [1, 1]} : vector<3x128xf32> to vector<1x128xf32>
    %16 = vector.broadcast %14 : vector<8x1xf32> to vector<8x128xf32>
    %17 = vector.broadcast %15 : vector<1x128xf32> to vector<8x128xf32>
    %18 = arith.mulf %16, %17 : vector<8x128xf32>
    %19 = arith.addf %13, %18 : vector<8x128xf32>
    %c0_3 = arith.constant 0 : index
    %c0_4 = arith.constant 0 : index
    %20 = vector.load %arg3[%c0_3, %c0_4] : memref<1x128xf32, #tpu.memory_space<vmem>>, vector<1x128xf32>
    %21 = vector.broadcast %20 : vector<1x128xf32> to vector<8x128xf32>
    %22 = arith.addf %19, %21 : vector<8x128xf32>
    %cst = arith.constant 0.000000e+00 : f32
    %23 = vector.broadcast %cst : f32 to vector<8x128xf32>
    %24 = arith.cmpf ogt, %22, %23 : vector<8x128xf32>
    %cst_5 = arith.constant 0.00999999977 : f32
    %25 = vector.broadcast %cst_5 : f32 to vector<8x128xf32>
    %26 = arith.mulf %25, %22 : vector<8x128xf32>
    %27 = arith.select %24, %22, %26 : vector<8x128xi1>, vector<8x128xf32>
    %c0_6 = arith.constant 0 : index
    %c0_7 = arith.constant 0 : index
    %28 = vector.load %arg4[%c0_6, %c0_7] : memref<128x256xbf16, #tpu.memory_space<vmem>>, vector<128x256xbf16>
    %29 = arith.extf %28 : vector<128x256xbf16> to vector<128x256xf32>
    %cst_8 = arith.constant dense<0.000000e+00> : vector<8x256xf32>
    %30 = tpu.matmul %27, %29, %cst_8 {dimension_numbers = #tpu.dot_dimension_numbers<[1], [0], [0], [1], [0, 0, 1, 1], [], []>} : vector<8x128xf32>, vector<128x256xf32>, vector<8x256xf32> -> vector<8x256xf32>
    %c0_9 = arith.constant 0 : index
    %c0_10 = arith.constant 0 : index
    %31 = vector.load %arg5[%c0_9, %c0_10] : memref<1x256xf32, #tpu.memory_space<vmem>>, vector<1x256xf32>
    %32 = vector.broadcast %31 : vector<1x256xf32> to vector<8x256xf32>
    %33 = arith.addf %30, %32 : vector<8x256xf32>
    %cst_11 = arith.constant 0.000000e+00 : f32
    %34 = vector.broadcast %cst_11 : f32 to vector<8x256xf32>
    %35 = arith.cmpf ogt, %33, %34 : vector<8x256xf32>
    %cst_12 = arith.constant 0.00999999977 : f32
    %36 = vector.broadcast %cst_12 : f32 to vector<8x256xf32>
    %37 = arith.mulf %36, %33 : vector<8x256xf32>
    %38 = arith.select %35, %33, %37 : vector<8x256xi1>, vector<8x256xf32>
    %c0_13 = arith.constant 0 : index
    %c0_14 = arith.constant 0 : index
    %39 = vector.load %arg6[%c0_13, %c0_14] : memref<256x128xbf16, #tpu.memory_space<vmem>>, vector<256x128xbf16>
    %40 = arith.extf %39 : vector<256x128xbf16> to vector<256x128xf32>
    %cst_15 = arith.constant dense<0.000000e+00> : vector<8x128xf32>
    %41 = tpu.matmul %38, %40, %cst_15 {dimension_numbers = #tpu.dot_dimension_numbers<[1], [0], [0], [1], [0, 0, 1, 1], [], []>} : vector<8x256xf32>, vector<256x128xf32>, vector<8x128xf32> -> vector<8x128xf32>
    %c0_16 = arith.constant 0 : index
    %c0_17 = arith.constant 0 : index
    %42 = vector.load %arg7[%c0_16, %c0_17] : memref<1x128xf32, #tpu.memory_space<vmem>>, vector<1x128xf32>
    %43 = vector.broadcast %42 : vector<1x128xf32> to vector<8x128xf32>
    %44 = arith.addf %41, %43 : vector<8x128xf32>
    %cst_18 = arith.constant 0.000000e+00 : f32
    %45 = vector.broadcast %cst_18 : f32 to vector<8x128xf32>
    %46 = arith.cmpf ogt, %44, %45 : vector<8x128xf32>
    %cst_19 = arith.constant 0.00999999977 : f32
    %47 = vector.broadcast %cst_19 : f32 to vector<8x128xf32>
    %48 = arith.mulf %47, %44 : vector<8x128xf32>
    %49 = arith.select %46, %44, %48 : vector<8x128xi1>, vector<8x128xf32>
    %c0_20 = arith.constant 0 : index
    %c0_21 = arith.constant 0 : index
    %50 = vector.load %arg8[%c0_20, %c0_21] : memref<128x128xbf16, #tpu.memory_space<vmem>>, vector<128x128xbf16>
    %51 = arith.extf %50 : vector<128x128xbf16> to vector<128x128xf32>
    %cst_22 = arith.constant dense<0.000000e+00> : vector<8x128xf32>
    %52 = tpu.matmul %49, %51, %cst_22 {dimension_numbers = #tpu.dot_dimension_numbers<[1], [0], [0], [1], [0, 0, 1, 1], [], []>} : vector<8x128xf32>, vector<128x128xf32>, vector<8x128xf32> -> vector<8x128xf32>
    %c0_23 = arith.constant 0 : index
    %c0_24 = arith.constant 0 : index
    %53 = vector.load %arg9[%c0_23, %c0_24] : memref<1x128xf32, #tpu.memory_space<vmem>>, vector<1x128xf32>
    %54 = vector.broadcast %53 : vector<1x128xf32> to vector<8x128xf32>
    %55 = arith.addf %52, %54 : vector<8x128xf32>
    %cst_25 = arith.constant 0.000000e+00 : f32
    %56 = vector.broadcast %cst_25 : f32 to vector<8x128xf32>
    %57 = arith.maximumf %55, %56 : vector<8x128xf32>
    %cst_26 = arith.constant 9.99999974E-5 : f32
    %58 = vector.broadcast %cst_26 : f32 to vector<8x128xf32>
    %59 = arith.addf %57, %58 : vector<8x128xf32>
    %c0_27 = arith.constant 0 : index
    %c0_28 = arith.constant 0 : index
    %60 = vector.load %arg10[%c0_27, %c0_28] : memref<8x128xf32, #tpu.memory_space<vmem>>, vector<8x128xf32>
    tpu.vector_store %arg10[%c0_27, %c0_28], %59 {strides = array<i32>} : memref<8x128xf32, #tpu.memory_space<vmem>>, vector<8x128xf32>,
    return
  }
  func.func @transform_0(%arg0: i32) -> (i32, i32) {
    %c0_i32 = arith.constant 0 : i32
    %c0_i32_0 = arith.constant 0 : i32
    return %arg0, %c0_i32 : i32, i32
  }
  func.func @transform_1(%arg0: i32) -> (i32, i32) {
    %c0_i32 = arith.constant 0 : i32
    %c0_i32_0 = arith.constant 0 : i32
    %c0_i32_1 = arith.constant 0 : i32
    return %c0_i32, %c0_i32_0 : i32, i32
  }
  func.func @transform_2(%arg0: i32) -> (i32, i32) {
    %c0_i32 = arith.constant 0 : i32
    %c0_i32_0 = arith.constant 0 : i32
    %c0_i32_1 = arith.constant 0 : i32
    return %c0_i32, %c0_i32_0 : i32, i32
  }
  func.func @transform_3(%arg0: i32) -> (i32, i32) {
    %c0_i32 = arith.constant 0 : i32
    %c0_i32_0 = arith.constant 0 : i32
    %c0_i32_1 = arith.constant 0 : i32
    return %c0_i32, %c0_i32_0 : i32, i32
  }
  func.func @transform_4(%arg0: i32) -> (i32, i32) {
    %c0_i32 = arith.constant 0 : i32
    %c0_i32_0 = arith.constant 0 : i32
    %c0_i32_1 = arith.constant 0 : i32
    return %c0_i32, %c0_i32_0 : i32, i32
  }
  func.func @transform_5(%arg0: i32) -> (i32, i32) {
    %c0_i32 = arith.constant 0 : i32
    %c0_i32_0 = arith.constant 0 : i32
    %c0_i32_1 = arith.constant 0 : i32
    return %c0_i32, %c0_i32_0 : i32, i32
  }
  func.func @transform_6(%arg0: i32) -> (i32, i32) {
    %c0_i32 = arith.constant 0 : i32
    %c0_i32_0 = arith.constant 0 : i32
    %c0_i32_1 = arith.constant 0 : i32
    return %c0_i32, %c0_i32_0 : i32, i32
  }
  func.func @transform_7(%arg0: i32) -> (i32, i32) {
    %c0_i32 = arith.constant 0 : i32
    %c0_i32_0 = arith.constant 0 : i32
    %c0_i32_1 = arith.constant 0 : i32
    return %c0_i32, %c0_i32_0 : i32, i32
  }
  func.func @transform_8(%arg0: i32) -> (i32, i32) {
    %c0_i32 = arith.constant 0 : i32
    %c0_i32_0 = arith.constant 0 : i32
    %c0_i32_1 = arith.constant 0 : i32
    return %c0_i32, %c0_i32_0 : i32, i32
  }
  func.func @transform_9(%arg0: i32) -> (i32, i32) {
    %c0_i32 = arith.constant 0 : i32
    %c0_i32_0 = arith.constant 0 : i32
    return %arg0, %c0_i32 : i32, i32
  }
}

</mosaic_0001>

<llo_original>
// kernel: tpu_custom_call.1
$region0: #{tpu_custom_call.1}
  #allocation0 [shape = 'u32[]', space=smem, size = 0x4, offset = 0x4, fixed_abs, tag = 'smem constant byte address 0x4 - core index']
  #allocation1 [shape = 'u32[144,128]{1,0:T(1,128)}', space=vmem, size = 0x12000, scoped, tag = 'internal scratch']
  %s0 = inlined_call_operand.vmem [shape: f32[8,3], index: 0, kind: input, shape index: {}]
  %s1 = inlined_call_operand.vmem [shape: bf16[3,128], index: 1, kind: input, shape index: {}]
  %s2 = inlined_call_operand.vmem [shape: f32[1,128], index: 2, kind: input, shape index: {}]
  %s3 = inlined_call_operand.hbm [shape: bf16[128,256], index: 3, kind: input, shape index: {}]
  %s4 = inlined_call_operand.vmem [shape: f32[1,256], index: 4, kind: input, shape index: {}]
  %s5 = inlined_call_operand.hbm [shape: bf16[256,128], index: 5, kind: input, shape index: {}]
  %s6 = inlined_call_operand.vmem [shape: f32[1,128], index: 6, kind: input, shape index: {}]
  %s7 = inlined_call_operand.hbm [shape: bf16[128,128], index: 7, kind: input, shape index: {}]
  %s8 = inlined_call_operand.vmem [shape: f32[1,128], index: 8, kind: input, shape index: {}]
  %s9 = inlined_call_operand.hbm [shape: f32[8,128], index: 9, kind: output, shape index: {}]
  %s10 = sld [smem:[#allocation0]]
  $region58: #{tpu_custom_call.1} parent=0
    _
  %s12 = ssub.s32 1, %s10
  %s13 = scalar_select 0, %s12, %s10
  $region1: #{tpu_custom_call.1} parent=0
    #allocation2 [shape = 'u8[65536]{0}', space=vmem, size = 0x10000, scoped, tag = 'input window, operand 3, single buffered']
    #allocation3 [shape = 's32[1]{0}', space=sflag, size = 0x4, scoped, tag = 'scoped memory for tpu_custom_call.1']
    #allocation4 [shape = 's32[1]{0}', space=sflag, size = 0x4, scoped, tag = 'scoped memory for tpu_custom_call.1']
    #allocation5 [shape = 'u8[65536]{0}', space=vmem, size = 0x10000, scoped, tag = 'input window, operand 5, single buffered']
    #allocation6 [shape = 's32[1]{0}', space=sflag, size = 0x4, scoped, tag = 'scoped memory for tpu_custom_call.1']
    #allocation7 [shape = 'u8[32768]{0}', space=vmem, size = 0x8000, scoped, tag = 'input window, operand 7, single buffered']
    #allocation8 [shape = 'u8[4096]{0}', space=vmem, size = 0x1000, scoped, tag = 'output window, operand 0, single buffered']
    %14 = vsyncpa [#allocation3], 0
    %15 = vsyncpa [#allocation6], 0
    %16 = vsyncpa [#allocation4], 0
    // Predicated region
    $region2: #{tpu_custom_call.1} parent=1 // pred_check
      _
    $region3: #{tpu_custom_call.1} parent=1 // pred_check_branch
      %18 = sbr.rel (0) target = $region5
    $region4: #{tpu_custom_call.1} parent=1 // pred_region
      _
    $region5: #{tpu_custom_call.1} parent=1 // pred_fallthru
      _
    // Predicated region
    $region6: #{tpu_custom_call.1} parent=1 // pred_check
      _
    $region7: #{tpu_custom_call.1} parent=1 // pred_check_branch
      %20 = sbr.rel (0) target = $region9
    $region8: #{tpu_custom_call.1} parent=1 // pred_region
      _
    $region9: #{tpu_custom_call.1} parent=1 // pred_fallthru
      _
    // Predicated region
    $region10: #{tpu_custom_call.1} parent=1 // pred_check
      _
    $region11: #{tpu_custom_call.1} parent=1 // pred_check_branch
      %22 = sbr.rel (0) target = $region13
    $region12: #{tpu_custom_call.1} parent=1 // pred_region
      _
    $region13: #{tpu_custom_call.1} parent=1 // pred_fallthru
      _
    // Predicated region
    $region14: #{tpu_custom_call.1} parent=1 // pred_check
      _
    $region15: #{tpu_custom_call.1} parent=1 // pred_check_branch
      %24 = sbr.rel (0) target = $region17
    $region16: #{tpu_custom_call.1} parent=1 // pred_region
      %s26 = ssub.s32 2048, 2048
      %27 = vsyncadd [#allocation3], %s26
      %s28 = sshll.u32 [#allocation2], 4
      %s29 = int_to_ptr.vmem [resolvable:$true] %s28
      %34 = dma.hbm_to_vmem [thread:$0]  %s3, 2048, %s29, [#allocation3], 128, 128, 8
    $region17: #{tpu_custom_call.1} parent=1 // pred_fallthru
      _
    // Predicated region
    $region18: #{tpu_custom_call.1} parent=1 // pred_check
      _
    $region19: #{tpu_custom_call.1} parent=1 // pred_check_branch
      %36 = sbr.rel (0) target = $region21
    $region20: #{tpu_custom_call.1} parent=1 // pred_region
      _
    $region21: #{tpu_custom_call.1} parent=1 // pred_fallthru
      _
    // Predicated region
    $region22: #{tpu_custom_call.1} parent=1 // pred_check
      _
    $region23: #{tpu_custom_call.1} parent=1 // pred_check_branch
      %38 = sbr.rel (0) target = $region25
    $region24: #{tpu_custom_call.1} parent=1 // pred_region
      %s40 = ssub.s32 2048, 2048
      %41 = vsyncadd [#allocation6], %s40
      %s42 = sshll.u32 [#allocation5], 4
      %s43 = int_to_ptr.vmem [resolvable:$true] %s42
      %48 = dma.hbm_to_vmem [thread:$0]  %s5, 2048, %s43, [#allocation6], 64, 64, 4
    $region25: #{tpu_custom_call.1} parent=1 // pred_fallthru
      _
    // Predicated region
    $region26: #{tpu_custom_call.1} parent=1 // pred_check
      _
    $region27: #{tpu_custom_call.1} parent=1 // pred_check_branch
      %50 = sbr.rel (0) target = $region29
    $region28: #{tpu_custom_call.1} parent=1 // pred_region
      _
    $region29: #{tpu_custom_call.1} parent=1 // pred_fallthru
      _
    // Predicated region
    $region30: #{tpu_custom_call.1} parent=1 // pred_check
      _
    $region31: #{tpu_custom_call.1} parent=1 // pred_check_branch
      %52 = sbr.rel (0) target = $region33
    $region32: #{tpu_custom_call.1} parent=1 // pred_region
      %s54 = ssub.s32 1024, 1024
      %55 = vsyncadd [#allocation6], %s54
      %s56 = sshll.u32 [#allocation7], 4
      %s57 = int_to_ptr.vmem [resolvable:$true] %s56
      %62 = dma.hbm_to_vmem [thread:$0]  %s7, 1024, %s57, [#allocation6], 64, 64, 4
    $region33: #{tpu_custom_call.1} parent=1 // pred_fallthru
      _
    // Predicated region
    $region34: #{tpu_custom_call.1} parent=1 // pred_check
      _
    $region35: #{tpu_custom_call.1} parent=1 // pred_check_branch
      %64 = sbr.rel (0) target = $region37
    $region36: #{tpu_custom_call.1} parent=1 // pred_region
      _
    $region37: #{tpu_custom_call.1} parent=1 // pred_fallthru
      _
    // Predicated region
    $region38: #{tpu_custom_call.1} parent=1 // pred_check
      _
    $region39: #{tpu_custom_call.1} parent=1 // pred_check_branch
      %66 = sbr.rel (0) target = $region41
    $region40: #{tpu_custom_call.1} parent=1 // pred_region
      %67 = dma.done [#allocation3], 2048
    $region41: #{tpu_custom_call.1} parent=1 // pred_fallthru
      _
    // Predicated region
    $region42: #{tpu_custom_call.1} parent=1 // pred_check
      _
    $region43: #{tpu_custom_call.1} parent=1 // pred_check_branch
      %69 = sbr.rel (0) target = $region45
    $region44: #{tpu_custom_call.1} parent=1 // pred_region
      %70 = dma.done [#allocation6], 2048
    $region45: #{tpu_custom_call.1} parent=1 // pred_fallthru
      _
    // Predicated region
    $region46: #{tpu_custom_call.1} parent=1 // pred_check
      _
    $region47: #{tpu_custom_call.1} parent=1 // pred_check_branch
      %72 = sbr.rel (0) target = $region49
    $region48: #{tpu_custom_call.1} parent=1 // pred_region
      %73 = dma.done [#allocation6], 1024
    $region49: #{tpu_custom_call.1} parent=1 // pred_fallthru
      _
    %v74 = vld [vmem:[%s0] sm:$0xff]
    %v75 = vld [vmem:[%s1] sm:$0x3]
    %v76 = vunpack.c.l.bf16 %v75
    %78 = vset.pattern.permute.xlu0 0
    %79 = vperm.xlu0 %78, %v74
    %v80 = vpop.permute.xlu0 %79
    %v82 = vlaneseq
    %v83 = vshrl.u32 %v82, 7
    %v84 = vsub.s32 0, %v83
    %v85 = vrot.slane %v76, %v84
    %v86 = vmul.f32 %v80, %v85
    %87 = vset.pattern.permute.xlu0 1
    %88 = vperm.xlu0 %87, %v74
    %v89 = vpop.permute.xlu0 %88
    %v91 = vlaneseq
    %v92 = vshrl.u32 %v91, 7
    %v93 = vsub.s32 1, %v92
    %v94 = vrot.slane %v76, %v93
    %v95 = vmul.f32 %v89, %v94
    %v96 = vadd.f32 %v86, %v95
    %97 = vset.pattern.permute.xlu0 2
    %98 = vperm.xlu0 %97, %v74
    %v99 = vpop.permute.xlu0 %98
    %v101 = vlaneseq
    %v102 = vshrl.u32 %v101, 7
    %v103 = vsub.s32 2, %v102
    %v104 = vrot.slane %v76, %v103
    %v105 = vmul.f32 %v99, %v104
    %v106 = vadd.f32 %v96, %v105
    %v107 = vld [vmem:[%s2] sm:$0x1]
    %v109 = vlaneseq
    %v110 = vshrl.u32 %v109, 7
    %v111 = vsub.s32 0, %v110
    %v112 = vrot.slane %v107, %v111
    %v114 = vadd.f32 %v106, %v112
    %vm115 = vcmp.gt.f32.partialorder %v114, 0.0
    %v116 = vmul.f32 %v114, 0.01
    %v117 = vsel %vm115, %v114, %v116
    %v118 = vld [vmem:[#allocation2] sm:$0xff]
    %v119 = vld [vmem:[#allocation2 + $0x8] sm:$0xff]
    %v120 = vld [vmem:[#allocation2 + $0x10] sm:$0xff]
    %v121 = vld [vmem:[#allocation2 + $0x18] sm:$0xff]
    %v122 = vld [vmem:[#allocation2 + $0x20] sm:$0xff]
    %v123 = vld [vmem:[#allocation2 + $0x28] sm:$0xff]
    %v124 = vld [vmem:[#allocation2 + $0x30] sm:$0xff]
    %v125 = vld [vmem:[#allocation2 + $0x38] sm:$0xff]
    %v126 = vld [vmem:[#allocation2 + $0x40] sm:$0xff]
    %v127 = vld [vmem:[#allocation2 + $0x48] sm:$0xff]
    %v128 = vld [vmem:[#allocation2 + $0x50] sm:$0xff]
    %v129 = vld [vmem:[#allocation2 + $0x58] sm:$0xff]
    %v130 = vld [vmem:[#allocation2 + $0x60] sm:$0xff]
    %v131 = vld [vmem:[#allocation2 + $0x68] sm:$0xff]
    %v132 = vld [vmem:[#allocation2 + $0x70] sm:$0xff]
    %v133 = vld [vmem:[#allocation2 + $0x78] sm:$0xff]
    %v134 = vunpack.c.l.bf16 %v118
    %v135 = vunpack.c.h.bf16 %v118
    %v136 = vunpack.c.l.bf16 %v119
    %v137 = vunpack.c.h.bf16 %v119
    %v138 = vunpack.c.l.bf16 %v120
    %v139 = vunpack.c.h.bf16 %v120
    %v140 = vunpack.c.l.bf16 %v121
    %v141 = vunpack.c.h.bf16 %v121
    %v142 = vunpack.c.l.bf16 %v122
    %v143 = vunpack.c.h.bf16 %v122
    %v144 = vunpack.c.l.bf16 %v123
    %v145 = vunpack.c.h.bf16 %v123
    %v146 = vunpack.c.l.bf16 %v124
    %v147 = vunpack.c.h.bf16 %v124
    %v148 = vunpack.c.l.bf16 %v125
    %v149 = vunpack.c.h.bf16 %v125
    %v150 = vunpack.c.l.bf16 %v126
    %v151 = vunpack.c.h.bf16 %v126
    %v152 = vunpack.c.l.bf16 %v127
    %v153 = vunpack.c.h.bf16 %v127
    %v154 = vunpack.c.l.bf16 %v128
    %v155 = vunpack.c.h.bf16 %v128
    %v156 = vunpack.c.l.bf16 %v129
    %v157 = vunpack.c.h.bf16 %v129
    %v158 = vunpack.c.l.bf16 %v130
    %v159 = vunpack.c.h.bf16 %v130
    %v160 = vunpack.c.l.bf16 %v131
    %v161 = vunpack.c.h.bf16 %v131
    %v162 = vunpack.c.l.bf16 %v132
    %v163 = vunpack.c.h.bf16 %v132
    %v164 = vunpack.c.l.bf16 %v133
    %v165 = vunpack.c.h.bf16 %v133
    %v166 = vld [vmem:[%s4] sm:$0x3]
    %v168 = vlaneseq
    %v169 = vshrl.u32 %v168, 7
    %v170 = vsub.s32 0, %v169
    %v171 = vrot.slane %v166, %v170
    %v172 = vlaneseq
    %v173 = vshrl.u32 %v172, 7
    %v174 = vsub.s32 1, %v173
    %v175 = vrot.slane %v166, %v174
    %178 = vmatprep.subr.mxu0 %v165
    %179 = vmatpush1.msra.mxu0 %v164
    %180 = vmatprep.subr.mxu0 %v163
    %181 = vmatpush1.msra.mxu0 %v162
    %182 = vmatprep.subr.mxu0 %v161
    %183 = vmatpush1.msra.mxu0 %v160
    %184 = vmatprep.subr.mxu0 %v159
    %185 = vmatpush1.msra.mxu0 %v158
    %186 = vmatprep.subr.mxu0 %v157
    %187 = vmatpush1.msra.mxu0 %v156
    %188 = vmatprep.subr.mxu0 %v155
    %189 = vmatpush1.msra.mxu0 %v154
    %190 = vmatprep.subr.mxu0 %v153
    %191 = vmatpush1.msra.mxu0 %v152
    %192 = vmatprep.subr.mxu0 %v151
    %193 = vmatpush1.msra.mxu0 %v150
    %194 = vmatprep.subr.mxu0 %v149
    %195 = vmatpush1.msra.mxu0 %v148
    %196 = vmatprep.subr.mxu0 %v147
    %197 = vmatpush1.msra.mxu0 %v146
    %198 = vmatprep.subr.mxu0 %v145
    %199 = vmatpush1.msra.mxu0 %v144
    %200 = vmatprep.subr.mxu0 %v143
    %201 = vmatpush1.msra.mxu0 %v142
    %202 = vmatprep.subr.mxu0 %v141
    %203 = vmatpush1.msra.mxu0 %v140
    %204 = vmatprep.subr.mxu0 %v139
    %205 = vmatpush1.msra.mxu0 %v138
    %206 = vmatprep.subr.mxu0 %v137
    %207 = vmatpush1.msra.mxu0 %v136
    %208 = vmatprep.subr.mxu0 %v135
    %209 = vmatpush1.msra.mxu0 %v134
    %210 = vmatprep.subr.mxu0 0.0
    %211 = vmatpush2.msra.mxu0 0.0
    %212 = vmatprep.subr.mxu0 0.0
    %213 = vmatpush2.msra.mxu0 0.0
    %214 = vmatprep.subr.mxu0 0.0
    %215 = vmatpush2.msra.mxu0 0.0
    %216 = vmatprep.subr.mxu0 0.0
    %217 = vmatpush2.msra.mxu0 0.0
    %218 = vmatprep.subr.mxu0 0.0
    %219 = vmatpush2.msra.mxu0 0.0
    %220 = vmatprep.subr.mxu0 0.0
    %221 = vmatpush2.msra.mxu0 0.0
    %222 = vmatprep.subr.mxu0 0.0
    %223 = vmatpush2.msra.mxu0 0.0
    %224 = vmatprep.subr.mxu0 0.0
    %225 = vmatpush2.msra.mxu0 0.0
    %226 = vmatprep.subr.mxu0 0.0
    %227 = vmatpush2.msra.mxu0 0.0
    %228 = vmatprep.subr.mxu0 0.0
    %229 = vmatpush2.msra.mxu0 0.0
    %230 = vmatprep.subr.mxu0 0.0
    %231 = vmatpush2.msra.mxu0 0.0
    %232 = vmatprep.subr.mxu0 0.0
    %233 = vmatpush2.msra.mxu0 0.0
    %234 = vmatprep.subr.mxu0 0.0
    %235 = vmatpush2.msra.mxu0 0.0
    %236 = vmatprep.subr.mxu0 0.0
    %237 = vmatpush2.msra.mxu0 0.0
    %238 = vmatprep.subr.mxu0 0.0
    %239 = vmatpush2.msra.mxu0 0.0
    %240 = vmatprep.subr.mxu0 0.0
    %241 = vmatpush2.msra.mxu0 0.0
    %242 = vmatprep.mubr.f32.mxu0 0.0
    %243 = vmatmul.mubr.f32.gmra.mxu0 %v117
    %v244 = vpop.f32.mrf.mxu0
    %v245 = vadd.f32 %v171, %v244
    %v246 = vpop.f32.mrf.mxu0
    %v247 = vadd.f32 %v175, %v246
    %248 = vdwg.mxu0
    %vm249 = vcmp.gt.f32.partialorder %v245, 0.0
    %vm250 = vcmp.gt.f32.partialorder %v247, 0.0
    %v251 = vmul.f32 %v245, 0.01
    %v252 = vmul.f32 %v247, 0.01
    %v253 = vsel %vm249, %v245, %v251
    %v254 = vsel %vm250, %v247, %v252
    %v255 = vld [vmem:[#allocation5] sm:$0xf]
    %v256 = vld [vmem:[#allocation5 + $0x4] sm:$0xf]
    %v257 = vld [vmem:[#allocation5 + $0x8] sm:$0xf]
    %v258 = vld [vmem:[#allocation5 + $0xc] sm:$0xf]
    %v259 = vld [vmem:[#allocation5 + $0x10] sm:$0xf]
    %v260 = vld [vmem:[#allocation5 + $0x14] sm:$0xf]
    %v261 = vld [vmem:[#allocation5 + $0x18] sm:$0xf]
    %v262 = vld [vmem:[#allocation5 + $0x1c] sm:$0xf]
    %v263 = vld [vmem:[#allocation5 + $0x20] sm:$0xf]
    %v264 = vld [vmem:[#allocation5 + $0x24] sm:$0xf]
    %v265 = vld [vmem:[#allocation5 + $0x28] sm:$0xf]
    %v266 = vld [vmem:[#allocation5 + $0x2c] sm:$0xf]
    %v267 = vld [vmem:[#allocation5 + $0x30] sm:$0xf]
    %v268 = vld [vmem:[#allocation5 + $0x34] sm:$0xf]
    %v269 = vld [vmem:[#allocation5 + $0x38] sm:$0xf]
    %v270 = vld [vmem:[#allocation5 + $0x3c] sm:$0xf]
    %v271 = vld [vmem:[#allocation5 + $0x40] sm:$0xf]
    %v272 = vld [vmem:[#allocation5 + $0x44] sm:$0xf]
    %v273 = vld [vmem:[#allocation5 + $0x48] sm:$0xf]
    %v274 = vld [vmem:[#allocation5 + $0x4c] sm:$0xf]
    %v275 = vld [vmem:[#allocation5 + $0x50] sm:$0xf]
    %v276 = vld [vmem:[#allocation5 + $0x54] sm:$0xf]
    %v277 = vld [vmem:[#allocation5 + $0x58] sm:$0xf]
    %v278 = vld [vmem:[#allocation5 + $0x5c] sm:$0xf]
    %v279 = vld [vmem:[#allocation5 + $0x60] sm:$0xf]
    %v280 = vld [vmem:[#allocation5 + $0x64] sm:$0xf]
    %v281 = vld [vmem:[#allocation5 + $0x68] sm:$0xf]
    %v282 = vld [vmem:[#allocation5 + $0x6c] sm:$0xf]
    %v283 = vld [vmem:[#allocation5 + $0x70] sm:$0xf]
    %v284 = vld [vmem:[#allocation5 + $0x74] sm:$0xf]
    %v285 = vld [vmem:[#allocation5 + $0x78] sm:$0xf]
    %v286 = vld [vmem:[#allocation5 + $0x7c] sm:$0xf]
    %v287 = vunpack.c.l.bf16 %v255
    %v288 = vunpack.c.l.bf16 %v256
    %v289 = vunpack.c.l.bf16 %v257
    %v290 = vunpack.c.l.bf16 %v258
    %v291 = vunpack.c.l.bf16 %v259
    %v292 = vunpack.c.l.bf16 %v260
    %v293 = vunpack.c.l.bf16 %v261
    %v294 = vunpack.c.l.bf16 %v262
    %v295 = vunpack.c.l.bf16 %v263
    %v296 = vunpack.c.l.bf16 %v264
    %v297 = vunpack.c.l.bf16 %v265
    %v298 = vunpack.c.l.bf16 %v266
    %v299 = vunpack.c.l.bf16 %v267
    %v300 = vunpack.c.l.bf16 %v268
    %v301 = vunpack.c.l.bf16 %v269
    %v302 = vunpack.c.l.bf16 %v270
    %v303 = vunpack.c.l.bf16 %v271
    %v304 = vunpack.c.l.bf16 %v272
    %v305 = vunpack.c.l.bf16 %v273
    %v306 = vunpack.c.l.bf16 %v274
    %v307 = vunpack.c.l.bf16 %v275
    %v308 = vunpack.c.l.bf16 %v276
    %v309 = vunpack.c.l.bf16 %v277
    %v310 = vunpack.c.l.bf16 %v278
    %v311 = vunpack.c.l.bf16 %v279
    %v312 = vunpack.c.l.bf16 %v280
    %v313 = vunpack.c.l.bf16 %v281
    %v314 = vunpack.c.l.bf16 %v282
    %v315 = vunpack.c.l.bf16 %v283
    %v316 = vunpack.c.l.bf16 %v284
    %v317 = vunpack.c.l.bf16 %v285
    %v318 = vunpack.c.l.bf16 %v286
    %v319 = vld [vmem:[%s6] sm:$0x1]
    %v321 = vlaneseq
    %v322 = vshrl.u32 %v321, 7
    %v323 = vsub.s32 0, %v322
    %v324 = vrot.slane %v319, %v323
    %326 = vmatprep.subr.mxu0 0.0
    %327 = vmatpush1.msra.mxu0 %v302
    %328 = vmatprep.subr.mxu0 0.0
    %329 = vmatpush1.msra.mxu0 %v301
    %330 = vmatprep.subr.mxu0 0.0
    %331 = vmatpush1.msra.mxu0 %v300
    %332 = vmatprep.subr.mxu0 0.0
    %333 = vmatpush1.msra.mxu0 %v299
    %334 = vmatprep.subr.mxu0 0.0
    %335 = vmatpush1.msra.mxu0 %v298
    %336 = vmatprep.subr.mxu0 0.0
    %337 = vmatpush1.msra.mxu0 %v297
    %338 = vmatprep.subr.mxu0 0.0
    %339 = vmatpush1.msra.mxu0 %v296
    %340 = vmatprep.subr.mxu0 0.0
    %341 = vmatpush1.msra.mxu0 %v295
    %342 = vmatprep.subr.mxu0 0.0
    %343 = vmatpush1.msra.mxu0 %v294
    %344 = vmatprep.subr.mxu0 0.0
    %345 = vmatpush1.msra.mxu0 %v293
    %346 = vmatprep.subr.mxu0 0.0
    %347 = vmatpush1.msra.mxu0 %v292
    %348 = vmatprep.subr.mxu0 0.0
    %349 = vmatpush1.msra.mxu0 %v291
    %350 = vmatprep.subr.mxu0 0.0
    %351 = vmatpush1.msra.mxu0 %v290
    %352 = vmatprep.subr.mxu0 0.0
    %353 = vmatpush1.msra.mxu0 %v289
    %354 = vmatprep.subr.mxu0 0.0
    %355 = vmatpush1.msra.mxu0 %v288
    %356 = vmatprep.subr.mxu0 0.0
    %357 = vmatpush1.msra.mxu0 %v287
    %358 = vmatprep.subr.mxu0 0.0
    %359 = vmatpush2.msra.mxu0 %v318
    %360 = vmatprep.subr.mxu0 0.0
    %361 = vmatpush2.msra.mxu0 %v317
    %362 = vmatprep.subr.mxu0 0.0
    %363 = vmatpush2.msra.mxu0 %v316
    %364 = vmatprep.subr.mxu0 0.0
    %365 = vmatpush2.msra.mxu0 %v315
    %366 = vmatprep.subr.mxu0 0.0
    %367 = vmatpush2.msra.mxu0 %v314
    %368 = vmatprep.subr.mxu0 0.0
    %369 = vmatpush2.msra.mxu0 %v313
    %370 = vmatprep.subr.mxu0 0.0
    %371 = vmatpush2.msra.mxu0 %v312
    %372 = vmatprep.subr.mxu0 0.0
    %373 = vmatpush2.msra.mxu0 %v311
    %374 = vmatprep.subr.mxu0 0.0
    %375 = vmatpush2.msra.mxu0 %v310
    %376 = vmatprep.subr.mxu0 0.0
    %377 = vmatpush2.msra.mxu0 %v309
    %378 = vmatprep.subr.mxu0 0.0
    %379 = vmatpush2.msra.mxu0 %v308
    %380 = vmatprep.subr.mxu0 0.0
    %381 = vmatpush2.msra.mxu0 %v307
    %382 = vmatprep.subr.mxu0 0.0
    %383 = vmatpush2.msra.mxu0 %v306
    %384 = vmatprep.subr.mxu0 0.0
    %385 = vmatpush2.msra.mxu0 %v305
    %386 = vmatprep.subr.mxu0 0.0
    %387 = vmatpush2.msra.mxu0 %v304
    %388 = vmatprep.subr.mxu0 0.0
    %389 = vmatpush2.msra.mxu0 %v303
    %390 = vmatprep.mubr.f32.mxu0 %v254
    %391 = vmatmul.mubr.f32.gmra.mxu0 %v253
    %v392 = vpop.f32.mrf.mxu0
    %v393 = vadd.f32 %v324, %v392
    %v394 = vpop.f32.mrf.mxu0
    %395 = vdwg.mxu0
    %vm396 = vcmp.gt.f32.partialorder %v393, 0.0
    %v397 = vmul.f32 %v393, 0.01
    %v398 = vsel %vm396, %v393, %v397
    %v399 = vld [vmem:[#allocation7] sm:$0xf]
    %v400 = vld [vmem:[#allocation7 + $0x4] sm:$0xf]
    %v401 = vld [vmem:[#allocation7 + $0x8] sm:$0xf]
    %v402 = vld [vmem:[#allocation7 + $0xc] sm:$0xf]
    %v403 = vld [vmem:[#allocation7 + $0x10] sm:$0xf]
    %v404 = vld [vmem:[#allocation7 + $0x14] sm:$0xf]
    %v405 = vld [vmem:[#allocation7 + $0x18] sm:$0xf]
    %v406 = vld [vmem:[#allocation7 + $0x1c] sm:$0xf]
    %v407 = vld [vmem:[#allocation7 + $0x20] sm:$0xf]
    %v408 = vld [vmem:[#allocation7 + $0x24] sm:$0xf]
    %v409 = vld [vmem:[#allocation7 + $0x28] sm:$0xf]
    %v410 = vld [vmem:[#allocation7 + $0x2c] sm:$0xf]
    %v411 = vld [vmem:[#allocation7 + $0x30] sm:$0xf]
    %v412 = vld [vmem:[#allocation7 + $0x34] sm:$0xf]
    %v413 = vld [vmem:[#allocation7 + $0x38] sm:$0xf]
    %v414 = vld [vmem:[#allocation7 + $0x3c] sm:$0xf]
    %v415 = vunpack.c.l.bf16 %v399
    %v416 = vunpack.c.l.bf16 %v400
    %v417 = vunpack.c.l.bf16 %v401
    %v418 = vunpack.c.l.bf16 %v402
    %v419 = vunpack.c.l.bf16 %v403
    %v420 = vunpack.c.l.bf16 %v404
    %v421 = vunpack.c.l.bf16 %v405
    %v422 = vunpack.c.l.bf16 %v406
    %v423 = vunpack.c.l.bf16 %v407
    %v424 = vunpack.c.l.bf16 %v408
    %v425 = vunpack.c.l.bf16 %v409
    %v426 = vunpack.c.l.bf16 %v410
    %v427 = vunpack.c.l.bf16 %v411
    %v428 = vunpack.c.l.bf16 %v412
    %v429 = vunpack.c.l.bf16 %v413
    %v430 = vunpack.c.l.bf16 %v414
    %v431 = vld [vmem:[%s8] sm:$0x1]
    %v433 = vlaneseq
    %v434 = vshrl.u32 %v433, 7
    %v435 = vsub.s32 0, %v434
    %v436 = vrot.slane %v431, %v435
    %438 = vmatprep.subr.mxu0 0.0
    %439 = vmatpush1.msra.mxu0 %v430
    %440 = vmatprep.subr.mxu0 0.0
    %441 = vmatpush1.msra.mxu0 %v429
    %442 = vmatprep.subr.mxu0 0.0
    %443 = vmatpush1.msra.mxu0 %v428
    %444 = vmatprep.subr.mxu0 0.0
    %445 = vmatpush1.msra.mxu0 %v427
    %446 = vmatprep.subr.mxu0 0.0
    %447 = vmatpush1.msra.mxu0 %v426
    %448 = vmatprep.subr.mxu0 0.0
    %449 = vmatpush1.msra.mxu0 %v425
    %450 = vmatprep.subr.mxu0 0.0
    %451 = vmatpush1.msra.mxu0 %v424
    %452 = vmatprep.subr.mxu0 0.0
    %453 = vmatpush1.msra.mxu0 %v423
    %454 = vmatprep.subr.mxu0 0.0
    %455 = vmatpush1.msra.mxu0 %v422
    %456 = vmatprep.subr.mxu0 0.0
    %457 = vmatpush1.msra.mxu0 %v421
    %458 = vmatprep.subr.mxu0 0.0
    %459 = vmatpush1.msra.mxu0 %v420
    %460 = vmatprep.subr.mxu0 0.0
    %461 = vmatpush1.msra.mxu0 %v419
    %462 = vmatprep.subr.mxu0 0.0
    %463 = vmatpush1.msra.mxu0 %v418
    %464 = vmatprep.subr.mxu0 0.0
    %465 = vmatpush1.msra.mxu0 %v417
    %466 = vmatprep.subr.mxu0 0.0
    %467 = vmatpush1.msra.mxu0 %v416
    %468 = vmatprep.subr.mxu0 0.0
    %469 = vmatpush1.msra.mxu0 %v415
    %470 = vmatprep.subr.mxu0 0.0
    %471 = vmatpush2.msra.mxu0 0.0
    %472 = vmatprep.subr.mxu0 0.0
    %473 = vmatpush2.msra.mxu0 0.0
    %474 = vmatprep.subr.mxu0 0.0
    %475 = vmatpush2.msra.mxu0 0.0
    %476 = vmatprep.subr.mxu0 0.0
    %477 = vmatpush2.msra.mxu0 0.0
    %478 = vmatprep.subr.mxu0 0.0
    %479 = vmatpush2.msra.mxu0 0.0
    %480 = vmatprep.subr.mxu0 0.0
    %481 = vmatpush2.msra.mxu0 0.0
    %482 = vmatprep.subr.mxu0 0.0
    %483 = vmatpush2.msra.mxu0 0.0
    %484 = vmatprep.subr.mxu0 0.0
    %485 = vmatpush2.msra.mxu0 0.0
    %486 = vmatprep.subr.mxu0 0.0
    %487 = vmatpush2.msra.mxu0 0.0
    %488 = vmatprep.subr.mxu0 0.0
    %489 = vmatpush2.msra.mxu0 0.0
    %490 = vmatprep.subr.mxu0 0.0
    %491 = vmatpush2.msra.mxu0 0.0
    %492 = vmatprep.subr.mxu0 0.0
    %493 = vmatpush2.msra.mxu0 0.0
    %494 = vmatprep.subr.mxu0 0.0
    %495 = vmatpush2.msra.mxu0 0.0
    %496 = vmatprep.subr.mxu0 0.0
    %497 = vmatpush2.msra.mxu0 0.0
    %498 = vmatprep.subr.mxu0 0.0
    %499 = vmatpush2.msra.mxu0 0.0
    %500 = vmatprep.subr.mxu0 0.0
    %501 = vmatpush2.msra.mxu0 0.0
    %502 = vmatprep.mubr.f32.mxu0 0.0
    %503 = vmatmul.mubr.f32.gmra.mxu0 %v398
    %v504 = vpop.f32.mrf.mxu0
    %v505 = vadd.f32 %v436, %v504
    %v506 = vpop.f32.mrf.mxu0
    %507 = vdwg.mxu0
    %v508 = vmax.f32 %v505, 0.0
    %v509 = vadd.f32 %v508, 0.0001
    %510 = vst [vmem:[#allocation8] sm:$0xff] %v509
    // Predicated region
    $region50: #{tpu_custom_call.1} parent=1 // pred_check
      _
    $region51: #{tpu_custom_call.1} parent=1 // pred_check_branch
      %512 = sbr.rel (0) target = $region53
    $region52: #{tpu_custom_call.1} parent=1 // pred_region
      %s514 = ssub.s32 128, 128
      %515 = vsyncadd [#allocation4], %s514
      %s517 = sshll.u32 [#allocation8], 4
      %s518 = int_to_ptr.vmem [resolvable:$true] %s517
      %520 = dma.vmem_to_hbm [thread:$0]  %s518, 128, %s9, [#allocation4]
    $region53: #{tpu_custom_call.1} parent=1 // pred_fallthru
      _
    // Predicated region
    $region54: #{tpu_custom_call.1} parent=1 // pred_check
      _
    $region55: #{tpu_custom_call.1} parent=1 // pred_check_branch
      %522 = sbr.rel (0) target = $region57
    $region56: #{tpu_custom_call.1} parent=1 // pred_region
      %523 = dma.done [#allocation4], 128
    $region57: #{tpu_custom_call.1} parent=1 // pred_fallthru
      _
    %524 = vsyncpa [#allocation3], 1
    %525 = vsyncpa [#allocation6], 1
    %526 = vsyncpa [#allocation4], 1

</llo_original>
